<compile_context>
chip_gen: v5e
topology: v5e:2x2
jax: 0.10.0
libtpu: 0.0.40
codegen_flags: <defaults>
</compile_context>

<pallas_src>
import functools

import jax
import jax.numpy as jnp
from jax.experimental import pallas as pl
from jax.experimental.pallas import tpu as pltpu


def _patch_merging_kernel(x_ref, w_ref, gamma_ref, beta_ref, o_ref, *, eps):
    # x_ref:     (tr, 2, wc, 2, D2, 2C)  row tile x h-parity x W2-cols x
    #                                    w-parity x (D2, d-parity*C + c)
    # w_ref:     (4, 2C, out_dim)        corner-pair weight slabs (VMEM resident)
    # gamma_ref: (1, out_dim)            LayerNorm scale
    # beta_ref:  (1, out_dim)            LayerNorm shift
    # o_ref:     (tr, wc*D2, out_dim)
    tr, _, wc, _, d2, two_c = x_ref.shape
    out_dim = o_ref.shape[-1]
    rows = tr * wc * d2

    def corner(k):
        w_par, h_par = divmod(k, 2)            # slab index k = w_par*2 + h_par
        xk = x_ref[:, h_par, :, w_par, :, :]   # (tr, wc, D2, 2C)
        # Rows enumerate (row-tile, w2 column, d2) = exactly the output order.
        return xk.reshape(rows, two_c)

    # Linear(8C -> out_dim, bias=False) as 4 accumulated corner-pair matmuls.
    # Native-dtype operands feed the MXU; accumulation is f32; no zeros init.
    y = jnp.dot(corner(0), w_ref[0], preferred_element_type=jnp.float32)
    for k in range(1, 4):
        y = y + jnp.dot(corner(k), w_ref[k], preferred_element_type=jnp.float32)

    # Fused LayerNorm over out_dim (one-pass mean / E[y^2], rsqrt on the EUP).
    s1 = jnp.sum(y, axis=-1, keepdims=True)
    s2 = jnp.sum(y * y, axis=-1, keepdims=True)
    mean = s1 * (1.0 / out_dim)
    var = s2 * (1.0 / out_dim) - mean * mean
    inv = jax.lax.rsqrt(var + eps)
    gamma = gamma_ref[...].astype(jnp.float32)
    beta = beta_ref[...].astype(jnp.float32)
    out = (y - mean) * inv * gamma + beta
    o_ref[...] = out.reshape(o_ref.shape).astype(o_ref.dtype)


def patch_merging_forward(x, w_reduction, gamma, beta, *, eps=1e-5,
                          target_rows=1024,
                          vmem_budget_bytes=24 * 1024 * 1024):
    """x: (B, H, W, D, C) -> (B, H//2, W//2, D//2, out_dim).

    w_reduction: (out_dim, 8*C)  -- PyTorch nn.Linear weight layout (no bias).
    gamma, beta: (out_dim,)      -- LayerNorm affine params.
    """
    B, H, W, D, C = x.shape
    assert H % 2 == 0 and W % 2 == 0 and D % 2 == 0
    H2, W2, D2 = H // 2, W // 2, D // 2
    out_dim = w_reduction.shape[0]
    assert w_reduction.shape == (out_dim, 8 * C)

    # ---- weight prep (tiny, host-side) ----
    # PyTorch flatten order of the 8C axis: q = d_par*4C + w_par*2C + h_par*C + c.
    # Regroup w^T into 4 slabs of shape (2C, out_dim); slab k = w_par*2 + h_par,
    # slab rows ordered (d_par, c) to match the x_view's trailing 2C dim.
    w_t = jnp.transpose(w_reduction)                      # (8C, out_dim)
    w_pairs = w_t.reshape(2, 2, 2, C, out_dim)            # (d_par, w_par, h_par, C, out)
    w_pairs = jnp.transpose(w_pairs, (1, 2, 0, 3, 4))     # (w_par, h_par, d_par, C, out)
    w_pairs = w_pairs.reshape(4, 2 * C, out_dim).astype(x.dtype)

    gamma_p = gamma.astype(jnp.float32).reshape(1, out_dim)
    beta_p = beta.astype(jnp.float32).reshape(1, out_dim)

    # Free (layout-preserving) view: (B*H2, h_par, W2, w_par, D2, d_par*C + c).
    x_view = x.reshape(B * H2, 2, W2, 2, D2, 2 * C)
    bh2 = B * H2

    in_item = x.dtype.itemsize
    out_item = in_item

    def est_vmem(tr, wc):
        x_blk = tr * 2 * wc * 2 * D2 * 2 * C * in_item
        o_blk = tr * wc * D2 * out_dim * out_item
        params = 4 * 2 * C * out_dim * in_item + 2 * out_dim * 4
        y_f32 = tr * wc * D2 * out_dim * 4
        tmp = 2 * x_blk                    # headroom for relayout / cast temps
        return 2 * (x_blk + o_blk) + 2 * params + y_f32 + tmp

    # Fold all of W2 into the block when it fits VMEM; otherwise the largest
    # divisor of W2 that fits (prefer wc*D2 % 8 == 0 for dense stores).
    wc = W2
    if est_vmem(1, wc) > vmem_budget_bytes:
        divisors = [d for d in range(W2, 0, -1) if W2 % d == 0]
        fitting = [d for d in divisors if est_vmem(1, d) <= vmem_budget_bytes]
        aligned = [d for d in fitting if (d * D2) % 8 == 0]
        wc = (aligned or fitting or [1])[0]

    # Row tile over the merged (B*H2) axis: target ~target_rows output rows per
    # grid step, keep >= 2 row tiles when possible (2 TensorCores on v7x),
    # stay inside the VMEM budget.
    tr = max(1, target_rows // (wc * D2))
    tr = min(tr, bh2)
    tr = min(tr, max(1, -(-bh2 // 2)))
    while tr > 1 and est_vmem(tr, wc) > vmem_budget_bytes:
        tr = max(1, tr // 2)

    grid = (pl.cdiv(bh2, tr), pl.cdiv(W2, wc))

    n_rows = bh2 * W2 * D2
    cost = pl.CostEstimate(
        flops=2 * n_rows * (8 * C) * out_dim + 10 * n_rows * out_dim,
        transcendentals=n_rows,
        bytes_accessed=(x.size * in_item
                        + w_pairs.size * w_pairs.dtype.itemsize
                        + n_rows * out_dim * out_item),
    )

    vmem_limit = int(min(max(est_vmem(tr, wc) * 3 // 2, 32 * 1024 * 1024),
                         48 * 1024 * 1024))

    out = pl.pallas_call(
        functools.partial(_patch_merging_kernel, eps=eps),
        out_shape=jax.ShapeDtypeStruct((bh2, W2 * D2, out_dim), x.dtype),
        grid_spec=pltpu.PrefetchScalarGridSpec(
            num_scalar_prefetch=0,
            grid=grid,
            in_specs=[
                # x: all four (h_par, w_par) corners, wc W2-columns and the
                # full (D2, 2C) slab for tr merged rows per step.  The Swin
                # permute lives entirely in this index_map -- no HBM transpose.
                pl.BlockSpec((tr, 2, wc, 2, D2, 2 * C),
                             lambda r, j: (r, 0, j, 0, 0, 0)),
                # Weights / affine params: constant index -> VMEM resident.
                pl.BlockSpec((4, 2 * C, out_dim), lambda r, j: (0, 0, 0)),
                pl.BlockSpec((1, out_dim), lambda r, j: (0, 0)),
                pl.BlockSpec((1, out_dim), lambda r, j: (0, 0)),
            ],
            # Output viewed as (B*H2, W2*D2, out_dim): second-minor store dim
            # is wc*D2 instead of a tiny D2, and the true out_dim is written
            # directly -> no lane padding, no post-kernel slice.
            out_specs=pl.BlockSpec((tr, wc * D2, out_dim),
                                   lambda r, j: (r, j, 0)),
        ),
        compiler_params=pltpu.CompilerParams(
            dimension_semantics=("parallel", "parallel"),
            vmem_limit_bytes=vmem_limit,
        ),
        cost_estimate=cost,
    )(x_view, w_pairs, gamma_p, beta_p)

    return out.reshape(B, H2, W2, D2, out_dim)


def _reference(x, w_reduction, gamma, beta, eps=1e-5):
    B, H, W, D, C = x.shape
    H2, W2, D2 = H // 2, W // 2, D // 2
    xr = x.reshape(B, H2, 2, W2, 2, D2, 2, C)
    xp = jnp.transpose(xr, (0, 1, 3, 5, 6, 4, 2, 7)).reshape(
        B, H2, W2, D2, 8 * C)
    y = jnp.einsum("...k,ok->...o", xp.astype(jnp.float32),
                   w_reduction.astype(jnp.float32))
    mean = jnp.mean(y, axis=-1, keepdims=True)
    var = jnp.mean((y - mean) ** 2, axis=-1, keepdims=True)
    return ((y - mean) * jax.lax.rsqrt(var + eps) * gamma + beta).astype(x.dtype)


if __name__ == "__main__":
    key = jax.random.PRNGKey(0)
    k_x, k_w, k_g, k_b = jax.random.split(key, 4)

    # Small shapes: B=2, H=W=8, D=4, C(dim)=4, out_dim = 3*dim = 12
    B, H, W, D, C = 2, 8, 8, 4, 4
    out_dim = 3 * C

    x = jax.random.normal(k_x, (B, H, W, D, C), dtype=jnp.float32)
    # deterministic parameter init (synthetic, not a checkpoint)
    w_reduction = (jax.random.normal(k_w, (out_dim, 8 * C), dtype=jnp.float32)
                   * (1.0 / jnp.sqrt(8.0 * C)))
    gamma = 1.0 + 0.1 * jax.random.normal(k_g, (out_dim,), dtype=jnp.float32)
    beta = 0.1 * jax.random.normal(k_b, (out_dim,), dtype=jnp.float32)

    out = patch_merging_forward(x, w_reduction, gamma, beta)
    out = jax.block_until_ready(out)

    ref = _reference(x, w_reduction, gamma, beta)
    assert out.shape == (B, H // 2, W // 2, D // 2, out_dim)
    assert jnp.allclose(out, ref, atol=2e-4, rtol=2e-4)

    print("KERNEL_OK")
</pallas_src>

<mosaic_0001>
module attributes {stable_mosaic.version = 11 : i64} {
  func.func @_patch_merging_kernel(%arg0: i32, %arg1: i32, %arg2: memref<4x2x4x2x2x8xf32, #tpu.memory_space<vmem>>, %arg3: memref<4x8x12xf32, #tpu.memory_space<vmem>>, %arg4: memref<1x12xf32, #tpu.memory_space<vmem>>, %arg5: memref<1x12xf32, #tpu.memory_space<vmem>>, %arg6: memref<4x8x12xf32, #tpu.memory_space<vmem>>) attributes {dimension_semantics = [#tpu.dimension_semantics<parallel>, #tpu.dimension_semantics<parallel>], iteration_bounds = array<i64: 2, 1>, scalar_prefetch = 0 : i64, scratch_operands = 0 : i64, tpu.core_type = #tpu.core_type<tc>, window_params = [{transform_indices = @transform_0, window_bounds = array<i64: 4, 2, 4, 2, 2, 8>}, {pipeline_mode = #tpu.pipeline_mode<synchronous>, transform_indices = @transform_1, window_bounds = array<i64: 4, 8, 12>}, {pipeline_mode = #tpu.pipeline_mode<synchronous>, transform_indices = @transform_2, window_bounds = array<i64: 1, 12>}, {pipeline_mode = #tpu.pipeline_mode<synchronous>, transform_indices = @transform_3, window_bounds = array<i64: 1, 12>}, {transform_indices = @transform_4, window_bounds = array<i64: 4, 8, 12>}]} {
    %c0 = arith.constant 0 : index
    %c0_0 = arith.constant 0 : index
    %c0_1 = arith.constant 0 : index
    %c0_2 = arith.constant 0 : index
    %c0_3 = arith.constant 0 : index
    %c0_4 = arith.constant 0 : index
    %0 = vector.load %arg2[%c0, %c0_0, %c0_1, %c0_2, %c0_3, %c0_4] : memref<4x2x4x2x2x8xf32, #tpu.memory_space<vmem>>, vector<4x1x4x1x2x8xf32>
    %1 = vector.shape_cast %0 : vector<4x1x4x1x2x8xf32> to vector<4x4x2x8xf32>
    %2 = vector.shape_cast %1 : vector<4x4x2x8xf32> to vector<32x8xf32>
    %c0_5 = arith.constant 0 : index
    %c0_6 = arith.constant 0 : index
    %c0_7 = arith.constant 0 : index
    %3 = vector.load %arg3[%c0_5, %c0_6, %c0_7] : memref<4x8x12xf32, #tpu.memory_space<vmem>>, vector<1x8x12xf32>
    %4 = vector.shape_cast %3 : vector<1x8x12xf32> to vector<8x12xf32>
    %cst = arith.constant dense<0.000000e+00> : vector<32x12xf32>
    %5 = tpu.matmul %2, %4, %cst {dimension_numbers = #tpu.dot_dimension_numbers<[1], [0], [0], [1], [0, 0, 1, 1], [], []>} : vector<32x8xf32>, vector<8x12xf32>, vector<32x12xf32> -> vector<32x12xf32>
    %c0_8 = arith.constant 0 : index
    %c1 = arith.constant 1 : index
    %c0_9 = arith.constant 0 : index
    %c0_10 = arith.constant 0 : index
    %c0_11 = arith.constant 0 : index
    %c0_12 = arith.constant 0 : index
    %6 = vector.load %arg2[%c0_8, %c1, %c0_9, %c0_10, %c0_11, %c0_12] : memref<4x2x4x2x2x8xf32, #tpu.memory_space<vmem>>, vector<4x1x4x1x2x8xf32>
    %7 = vector.shape_cast %6 : vector<4x1x4x1x2x8xf32> to vector<4x4x2x8xf32>
    %8 = vector.shape_cast %7 : vector<4x4x2x8xf32> to vector<32x8xf32>
    %c1_13 = arith.constant 1 : index
    %c0_14 = arith.constant 0 : index
    %c0_15 = arith.constant 0 : index
    %9 = vector.load %arg3[%c1_13, %c0_14, %c0_15] : memref<4x8x12xf32, #tpu.memory_space<vmem>>, vector<1x8x12xf32>
    %10 = vector.shape_cast %9 : vector<1x8x12xf32> to vector<8x12xf32>
    %cst_16 = arith.constant dense<0.000000e+00> : vector<32x12xf32>
    %11 = tpu.matmul %8, %10, %cst_16 {dimension_numbers = #tpu.dot_dimension_numbers<[1], [0], [0], [1], [0, 0, 1, 1], [], []>} : vector<32x8xf32>, vector<8x12xf32>, vector<32x12xf32> -> vector<32x12xf32>
    %12 = arith.addf %5, %11 : vector<32x12xf32>
    %c0_17 = arith.constant 0 : index
    %c0_18 = arith.constant 0 : index
    %c0_19 = arith.constant 0 : index
    %c1_20 = arith.constant 1 : index
    %c0_21 = arith.constant 0 : index
    %c0_22 = arith.constant 0 : index
    %13 = vector.load %arg2[%c0_17, %c0_18, %c0_19, %c1_20, %c0_21, %c0_22] : memref<4x2x4x2x2x8xf32, #tpu.memory_space<vmem>>, vector<4x1x4x1x2x8xf32>
    %14 = vector.shape_cast %13 : vector<4x1x4x1x2x8xf32> to vector<4x4x2x8xf32>
    %15 = vector.shape_cast %14 : vector<4x4x2x8xf32> to vector<32x8xf32>
    %c2 = arith.constant 2 : index
    %c0_23 = arith.constant 0 : index
    %c0_24 = arith.constant 0 : index
    %16 = vector.load %arg3[%c2, %c0_23, %c0_24] : memref<4x8x12xf32, #tpu.memory_space<vmem>>, vector<1x8x12xf32>
    %17 = vector.shape_cast %16 : vector<1x8x12xf32> to vector<8x12xf32>
    %cst_25 = arith.constant dense<0.000000e+00> : vector<32x12xf32>
    %18 = tpu.matmul %15, %17, %cst_25 {dimension_numbers = #tpu.dot_dimension_numbers<[1], [0], [0], [1], [0, 0, 1, 1], [], []>} : vector<32x8xf32>, vector<8x12xf32>, vector<32x12xf32> -> vector<32x12xf32>
    %19 = arith.addf %12, %18 : vector<32x12xf32>
    %c0_26 = arith.constant 0 : index
    %c1_27 = arith.constant 1 : index
    %c0_28 = arith.constant 0 : index
    %c1_29 = arith.constant 1 : index
    %c0_30 = arith.constant 0 : index
    %c0_31 = arith.constant 0 : index
    %20 = vector.load %arg2[%c0_26, %c1_27, %c0_28, %c1_29, %c0_30, %c0_31] : memref<4x2x4x2x2x8xf32, #tpu.memory_space<vmem>>, vector<4x1x4x1x2x8xf32>
    %21 = vector.shape_cast %20 : vector<4x1x4x1x2x8xf32> to vector<4x4x2x8xf32>
    %22 = vector.shape_cast %21 : vector<4x4x2x8xf32> to vector<32x8xf32>
    %c3 = arith.constant 3 : index
    %c0_32 = arith.constant 0 : index
    %c0_33 = arith.constant 0 : index
    %23 = vector.load %arg3[%c3, %c0_32, %c0_33] : memref<4x8x12xf32, #tpu.memory_space<vmem>>, vector<1x8x12xf32>
    %24 = vector.shape_cast %23 : vector<1x8x12xf32> to vector<8x12xf32>
    %cst_34 = arith.constant dense<0.000000e+00> : vector<32x12xf32>
    %25 = tpu.matmul %22, %24, %cst_34 {dimension_numbers = #tpu.dot_dimension_numbers<[1], [0], [0], [1], [0, 0, 1, 1], [], []>} : vector<32x8xf32>, vector<8x12xf32>, vector<32x12xf32> -> vector<32x12xf32>
    %26 = arith.addf %19, %25 : vector<32x12xf32>
    %cst_35 = arith.constant dense<0.000000e+00> : vector<32xf32>
    %27 = vector.multi_reduction <add>, %26, %cst_35 [1] : vector<32x12xf32> to vector<32xf32>
    %28 = vector.shape_cast %27 : vector<32xf32> to vector<32x1xf32>
    %29 = arith.mulf %26, %26 : vector<32x12xf32>
    %cst_36 = arith.constant dense<0.000000e+00> : vector<32xf32>
    %30 = vector.multi_reduction <add>, %29, %cst_36 [1] : vector<32x12xf32> to vector<32xf32>
    %31 = vector.shape_cast %30 : vector<32xf32> to vector<32x1xf32>
    %cst_37 = arith.constant 0.0833333358 : f32
    %32 = vector.broadcast %cst_37 : f32 to vector<32x1xf32>
    %33 = arith.mulf %28, %32 : vector<32x1xf32>
    %cst_38 = arith.constant 0.0833333358 : f32
    %34 = vector.broadcast %cst_38 : f32 to vector<32x1xf32>
    %35 = arith.mulf %31, %34 : vector<32x1xf32>
    %36 = arith.mulf %33, %33 : vector<32x1xf32>
    %37 = arith.subf %35, %36 : vector<32x1xf32>
    %cst_39 = arith.constant 9.99999974E-6 : f32
    %38 = vector.broadcast %cst_39 : f32 to vector<32x1xf32>
    %39 = arith.addf %37, %38 : vector<32x1xf32>
    %40 = math.rsqrt %39 : vector<32x1xf32>
    %c0_40 = arith.constant 0 : index
    %c0_41 = arith.constant 0 : index
    %41 = vector.load %arg4[%c0_40, %c0_41] : memref<1x12xf32, #tpu.memory_space<vmem>>, vector<1x12xf32>
    %c0_42 = arith.constant 0 : index
    %c0_43 = arith.constant 0 : index
    %42 = vector.load %arg5[%c0_42, %c0_43] : memref<1x12xf32, #tpu.memory_space<vmem>>, vector<1x12xf32>
    %43 = vector.broadcast %33 : vector<32x1xf32> to vector<32x12xf32>
    %44 = arith.subf %26, %43 : vector<32x12xf32>
    %45 = vector.broadcast %40 : vector<32x1xf32> to vector<32x12xf32>
    %46 = arith.mulf %44, %45 : vector<32x12xf32>
    %47 = vector.broadcast %41 : vector<1x12xf32> to vector<32x12xf32>
    %48 = arith.mulf %46, %47 : vector<32x12xf32>
    %49 = vector.broadcast %42 : vector<1x12xf32> to vector<32x12xf32>
    %50 = arith.addf %48, %49 : vector<32x12xf32>
    %51 = vector.shape_cast %50 : vector<32x12xf32> to vector<4x8x12xf32>
    %c0_44 = arith.constant 0 : index
    %c0_45 = arith.constant 0 : index
    %c0_46 = arith.constant 0 : index
    %52 = vector.load %arg6[%c0_44, %c0_45, %c0_46] : memref<4x8x12xf32, #tpu.memory_space<vmem>>, vector<4x8x12xf32>
    tpu.vector_store %arg6[%c0_44, %c0_45, %c0_46], %51 {strides = array<i32>} : memref<4x8x12xf32, #tpu.memory_space<vmem>>, vector<4x8x12xf32>,
    return
  }
  func.func @transform_0(%arg0: i32, %arg1: i32) -> (i32, i32, i32, i32, i32, i32) {
    %c0_i32 = arith.constant 0 : i32
    %c0_i32_0 = arith.constant 0 : i32
    %c0_i32_1 = arith.constant 0 : i32
    %c0_i32_2 = arith.constant 0 : i32
    %c0_i32_3 = arith.constant 0 : i32
    return %arg0, %c0_i32, %arg1, %c0_i32_0, %c0_i32_1, %c0_i32_2 : i32, i32, i32, i32, i32, i32
  }
  func.func @transform_1(%arg0: i32, %arg1: i32) -> (i32, i32, i32) {
    %c0_i32 = arith.constant 0 : i32
    %c0_i32_0 = arith.constant 0 : i32
    %c0_i32_1 = arith.constant 0 : i32
    %c0_i32_2 = arith.constant 0 : i32
    return %c0_i32, %c0_i32_0, %c0_i32_1 : i32, i32, i32
  }
  func.func @transform_2(%arg0: i32, %arg1: i32) -> (i32, i32) {
    %c0_i32 = arith.constant 0 : i32
    %c0_i32_0 = arith.constant 0 : i32
    %c0_i32_1 = arith.constant 0 : i32
    return %c0_i32, %c0_i32_0 : i32, i32
  }
  func.func @transform_3(%arg0: i32, %arg1: i32) -> (i32, i32) {
    %c0_i32 = arith.constant 0 : i32
    %c0_i32_0 = arith.constant 0 : i32
    %c0_i32_1 = arith.constant 0 : i32
    return %c0_i32, %c0_i32_0 : i32, i32
  }
  func.func @transform_4(%arg0: i32, %arg1: i32) -> (i32, i32, i32) {
    %c0_i32 = arith.constant 0 : i32
    %c0_i32_0 = arith.constant 0 : i32
    return %arg0, %arg1, %c0_i32 : i32, i32, i32
  }
}

</mosaic_0001>

<llo_original>
// kernel: tpu_custom_call.1
$region0: #{tpu_custom_call.1}
  #allocation0 [shape = 'u32[]', space=smem, size = 0x4, offset = 0x4, fixed_abs, tag = 'smem constant byte address 0x4 - core index']
  #allocation1 [shape = 'u32[72,128]{1,0:T(1,128)}', space=vmem, size = 0x9000, scoped, tag = 'internal scratch']
  %s0 = inlined_call_operand.hbm [shape: f32[8,2,4,2,2,8], index: 0, kind: input, shape index: {}]
  %s1 = inlined_call_operand.hbm [shape: f32[4,8,12], index: 1, kind: input, shape index: {}]
  %s2 = inlined_call_operand.vmem [shape: f32[1,12], index: 2, kind: input, shape index: {}]
  %s3 = inlined_call_operand.vmem [shape: f32[1,12], index: 3, kind: input, shape index: {}]
  %s4 = inlined_call_operand.hbm [shape: f32[8,8,12], index: 4, kind: output, shape index: {}]
  %s5 = sld [smem:[#allocation0]]
  $region57: #{tpu_custom_call.1} parent=0
    _
  %s7 = ssub.s32 1, %s5
  %s8 = scalar_select 0, %s7, %s5
  $region1: #{tpu_custom_call.1} parent=0
    #allocation2 [shape = 'u8[131072]{0}', space=vmem, size = 0x20000, scoped, tag = 'input window, operand 0']
    #allocation3 [shape = 's32[2]{0}', space=sflag, size = 0x8, scoped, tag = 'scoped memory for tpu_custom_call.1']
    #allocation4 [shape = 's32[2]{0}', space=sflag, size = 0x8, scoped, tag = 'scoped memory for tpu_custom_call.1']
    #allocation5 [shape = 'u8[16384]{0}', space=vmem, size = 0x4000, scoped, tag = 'input window, operand 1, single buffered']
    #allocation6 [shape = 's32[1]{0}', space=sflag, size = 0x4, scoped, tag = 'scoped memory for tpu_custom_call.1']
    #allocation7 [shape = 'u8[32768]{0}', space=vmem, size = 0x8000, scoped, tag = 'output window, operand 0']
    %9 = vsyncpa [#allocation3], 0
    %s10 = scalar_lea.sflag [#allocation3], 1
    %11 = vsyncpa %s10, 0
    %12 = vsyncpa [#allocation6], 0
    %13 = vsyncpa [#allocation4], 0
    %s14 = scalar_lea.sflag [#allocation4], 1
    %15 = vsyncpa %s14, 0
    loop: start=0, step=1, limit=4
    $region2: #{tpu_custom_call.1} parent=1 // loop_pre_header
      _
    $region3: #{tpu_custom_call.1} parent=1 // loop_header
      %s17 = sphi 0, %s21
      %p18 = scmp.ge.s32.totalorder %s17, 4
      %s24 = sphi 0, %s36
      %s25 = sphi 0, %s32
      %s26 = sphi 0, %s24
      %s27 = sphi 0, %s25
      %s28 = sphi 0, %s26
      %s29 = sphi 0, %s27
      %s41 = sphi 0, %s43
      %s44 = sphi 0, %s41
      %s45 = sphi 0, %s44
      %s61 = sphi 0, %s45
      %s65 = sphi 0, %s65
      %s67 = sphi 0, %s65
      %s68 = sphi 0, %s67
      %s82 = sphi 0, %s68
      %s86 = sphi 0, %s86
      %s88 = sphi 0, %s86
      %s89 = sphi 0, %s88
      %s103 = sphi 0, %s89
      %s107 = sphi 0, %s107
      %s109 = sphi 0, %s107
      %s110 = sphi 0, %s109
      %s124 = sphi 0, %s110
      %s132 = sphi 0, %s134
      %s135 = sphi 0, %s132
      %s136 = sphi 0, %s135
      %s152 = sphi 0, %s136
    $region4: #{tpu_custom_call.1} parent=1 // loop_header_branch
      %20 = sbr.rel (%p18) target = $region8
    $region5: #{tpu_custom_call.1} parent=1 // loop_body
      %s22 = ssub.s32 %s17, 1
      %s23 = ssub.s32 %s17, 2
      %s30 = sadd.s32 1, %s25
      %p31 = scmp.ge.s32.totalorder %s30, 1
      %s32 = scalar_select %p31, 0, %s30
      %s33 = sadd.s32 1, %s24
      %s34 = scalar_select %p31, %s33, %s24
      %p35 = scmp.ge.s32.totalorder %s34, 2
      %s36 = scalar_select %p35, 0, %s34
      %s37 = ssub.s32 %s24, %s36
      %s38 = ssub.s32 %s25, %s32
      %s39 = sor.u32 %s37, %s38
      %p40 = scmp.eq.s32.totalorder %s39, 0
      %s42 = sadd.s32 %s41, 1
      %s43 = scalar_select %p40, %s41, %s42
      %p46 = pneg %p40
      %p47 = scmp.eq.s32.totalorder %s17, 1
      %p48 = por %p46, %p47
      %p49 = scmp.ne.s32.totalorder %s41, %s44
      %p50 = scmp.eq.s32.totalorder %s17, 0
      %p51 = por %p49, %p50
      %p52 = scmp.ne.s32.totalorder %s41, %s44
      %p53 = scmp.eq.s32.totalorder %s22, 1
      %p54 = por %p52, %p53
      %p55 = scmp.ne.s32.totalorder %s44, %s45
      %p56 = scmp.eq.s32.totalorder %s22, 0
      %p57 = por %p55, %p56
      %p58 = scmp.ne.s32.totalorder %s44, %s45
      %p59 = scmp.eq.s32.totalorder %s23, 1
      %p60 = por %p58, %p59
      %p62 = scmp.ne.s32.totalorder %s45, %s61
      %p63 = scmp.eq.s32.totalorder %s23, 0
      %p64 = por %p62, %p63
      %s66 = sadd.s32 %s65, 1
      %p69 = scmp.eq.s32.totalorder %s17, 1
      %p70 = scmp.ne.s32.totalorder %s65, %s67
      %p71 = scmp.eq.s32.totalorder %s17, 0
      %p72 = por %p70, %p71
      %p73 = scmp.ne.s32.totalorder %s65, %s67
      %p74 = scmp.eq.s32.totalorder %s22, 1
      %p75 = por %p73, %p74
      %p76 = scmp.ne.s32.totalorder %s67, %s68
      %p77 = scmp.eq.s32.totalorder %s22, 0
      %p78 = por %p76, %p77
      %p79 = scmp.ne.s32.totalorder %s67, %s68
      %p80 = scmp.eq.s32.totalorder %s23, 1
      %p81 = por %p79, %p80
      %p83 = scmp.ne.s32.totalorder %s68, %s82
      %p84 = scmp.eq.s32.totalorder %s23, 0
      %p85 = por %p83, %p84
      %s87 = sadd.s32 %s86, 1
      %p90 = scmp.eq.s32.totalorder %s17, 1
      %p91 = scmp.ne.s32.totalorder %s86, %s88
      %p92 = scmp.eq.s32.totalorder %s17, 0
      %p93 = por %p91, %p92
      %p94 = scmp.ne.s32.totalorder %s86, %s88
      %p95 = scmp.eq.s32.totalorder %s22, 1
      %p96 = por %p94, %p95
      %p97 = scmp.ne.s32.totalorder %s88, %s89
      %p98 = scmp.eq.s32.totalorder %s22, 0
      %p99 = por %p97, %p98
      %p100 = scmp.ne.s32.totalorder %s88, %s89
      %p101 = scmp.eq.s32.totalorder %s23, 1
      %p102 = por %p100, %p101
      %p104 = scmp.ne.s32.totalorder %s89, %s103
      %p105 = scmp.eq.s32.totalorder %s23, 0
      %p106 = por %p104, %p105
      %s108 = sadd.s32 %s107, 1
      %p111 = scmp.eq.s32.totalorder %s17, 1
      %p112 = scmp.ne.s32.totalorder %s107, %s109
      %p113 = scmp.eq.s32.totalorder %s17, 0
      %p114 = por %p112, %p113
      %p115 = scmp.ne.s32.totalorder %s107, %s109
      %p116 = scmp.eq.s32.totalorder %s22, 1
      %p117 = por %p115, %p116
      %p118 = scmp.ne.s32.totalorder %s109, %s110
      %p119 = scmp.eq.s32.totalorder %s22, 0
      %p120 = por %p118, %p119
      %p121 = scmp.ne.s32.totalorder %s109, %s110
      %p122 = scmp.eq.s32.totalorder %s23, 1
      %p123 = por %p121, %p122
      %p125 = scmp.ne.s32.totalorder %s110, %s124
      %p126 = scmp.eq.s32.totalorder %s23, 0
      %p127 = por %p125, %p126
      %s128 = ssub.s32 %s24, %s36
      %s129 = ssub.s32 %s25, %s32
      %s130 = sor.u32 %s128, %s129
      %p131 = scmp.eq.s32.totalorder %s130, 0
      %s133 = sadd.s32 %s132, 1
      %s134 = scalar_select %p131, %s132, %s133
      %p137 = pneg %p131
      %p138 = scmp.eq.s32.totalorder %s17, 1
      %p139 = por %p137, %p138
      %p140 = scmp.ne.s32.totalorder %s132, %s135
      %p141 = scmp.eq.s32.totalorder %s17, 0
      %p142 = por %p140, %p141
      %p143 = scmp.ne.s32.totalorder %s132, %s135
      %p144 = scmp.eq.s32.totalorder %s22, 1
      %p145 = por %p143, %p144
      %p146 = scmp.ne.s32.totalorder %s135, %s136
      %p147 = scmp.eq.s32.totalorder %s22, 0
      %p148 = por %p146, %p147
      %p149 = scmp.ne.s32.totalorder %s135, %s136
      %p150 = scmp.eq.s32.totalorder %s23, 1
      %p151 = por %p149, %p150
      %p153 = scmp.ne.s32.totalorder %s136, %s152
      %p154 = scmp.eq.s32.totalorder %s23, 0
      %p155 = por %p153, %p154
      %p156 = scmp.le.s32.totalorder 1, %s17
      %p157 = scmp.lt.s32.totalorder %s17, 3
      %p158 = pnand %p156, %p157
      %p159 = pneg %p158
      // Predicated region
      $region9: #{tpu_custom_call.1} parent=5 // pred_check
        _
      $region10: #{tpu_custom_call.1} parent=5 // pred_check_branch
        %161 = sbr.rel (%p158) target = $region12
      $region11: #{tpu_custom_call.1} parent=5 // pred_region
        %s162 = ssub.s32 %s17, 1
        // Predicated region
        $region13: #{tpu_custom_call.1} parent=11 // pred_check
          %p163 = pneg %p78
        $region14: #{tpu_custom_call.1} parent=11 // pred_check_branch
          %165 = sbr.rel (%p163) target = $region16
        $region15: #{tpu_custom_call.1} parent=11 // pred_region
          %167 = vsyncadd [#allocation6], 0
          %s168 = sshll.u32 %s1, 4
          %s169 = int_to_ptr.hbm [resolvable:$true] %s168
          %s170 = sshll.u32 [#allocation5], 4
          %s171 = int_to_ptr.vmem [resolvable:$true] %s170
          %176 = dma.hbm_to_vmem [thread:$0]  %s169, 512, %s171, [#allocation6], 128, 128, 8
        $region16: #{tpu_custom_call.1} parent=11 // pred_fallthru
          _
        // Predicated region
        $region17: #{tpu_custom_call.1} parent=11 // pred_check
          %p177 = pneg %p99
        $region18: #{tpu_custom_call.1} parent=11 // pred_check_branch
          %179 = sbr.rel (%p177) target = $region20
        $region19: #{tpu_custom_call.1} parent=11 // pred_region
          _
        $region20: #{tpu_custom_call.1} parent=11 // pred_fallthru
          _
        // Predicated region
        $region21: #{tpu_custom_call.1} parent=11 // pred_check
          %p180 = pneg %p120
        $region22: #{tpu_custom_call.1} parent=11 // pred_check_branch
          %182 = sbr.rel (%p180) target = $region24
        $region23: #{tpu_custom_call.1} parent=11 // pred_region
          _
        $region24: #{tpu_custom_call.1} parent=11 // pred_fallthru
          _
      $region12: #{tpu_custom_call.1} parent=5 // pred_fallthru
        _
      %p183 = scmp.lt.s32.totalorder %s17, 2
      // Predicated region
      $region25: #{tpu_custom_call.1} parent=5 // pred_check
        %p184 = pneg %p183
      $region26: #{tpu_custom_call.1} parent=5 // pred_check_branch
        %186 = sbr.rel (%p184) target = $region28
      $region27: #{tpu_custom_call.1} parent=5 // pred_region
        // Predicated region
        $region29: #{tpu_custom_call.1} parent=27 // pred_check
          %p187 = pneg %p51
        $region30: #{tpu_custom_call.1} parent=27 // pred_check_branch
          %189 = sbr.rel (%p187) target = $region32
        $region31: #{tpu_custom_call.1} parent=27 // pred_region
          %s190 = sand.u32 %s41, 1
          %s191 = scalar_lea.sflag [#allocation3], %s190
          %s192 = sand.u32 %s41, 1
          %s193 = smul.addr %s192, 128
          %s194 = scalar_lea.vmem [#allocation2], %s193
          %s195 = smul.u32 4, %s24
          %s196 = smul.u32 4, %s25
          %198 = vsyncadd %s191, 0
          %s199 = smul.addr %s196, 2
          %s200 = smul.addr %s195, 16
          %s201 = sadd.s32 %s199, %s200
          %s202 = smul.addr %s201, 2
          %s203 = scalar_lea.hbm %s0, %s202
          %s204 = sshll.u32 %s203, 4
          %s205 = int_to_ptr.hbm [resolvable:$true] %s204
          %s206 = sshll.u32 %s194, 4
          %s207 = int_to_ptr.vmem [resolvable:$true] %s206
          %212 = dma.hbm_to_vmem [thread:$0]  %s205, 2048, %s207, %s191, 32, 32, 2
        $region32: #{tpu_custom_call.1} parent=27 // pred_fallthru
          _
      $region28: #{tpu_custom_call.1} parent=5 // pred_fallthru
        _
      %p213 = scmp.le.s32.totalorder 1, %s17
      %p214 = scmp.lt.s32.totalorder %s17, 3
      %p215 = pnand %p213, %p214
      %p216 = pneg %p215
      // Predicated region
      $region33: #{tpu_custom_call.1} parent=5 // pred_check
        _
      $region34: #{tpu_custom_call.1} parent=5 // pred_check_branch
        %218 = sbr.rel (%p215) target = $region36
      $region35: #{tpu_custom_call.1} parent=5 // pred_region
        %s219 = ssub.s32 %s17, 1
        %s220 = sand.u32 %s44, 1
        %s221 = scalar_lea.sflag [#allocation3], %s220
        %s222 = sand.u32 %s44, 1
        %s223 = smul.addr %s222, 128
        %s224 = scalar_lea.vmem [#allocation2], %s223
        // Predicated region
        $region37: #{tpu_custom_call.1} parent=35 // pred_check
          %p225 = pneg %p57
        $region38: #{tpu_custom_call.1} parent=35 // pred_check_branch
          %227 = sbr.rel (%p225) target = $region40
        $region39: #{tpu_custom_call.1} parent=35 // pred_region
          %229 = dma.done %s221, 2048
        $region40: #{tpu_custom_call.1} parent=35 // pred_fallthru
          _
        // Predicated region
        $region41: #{tpu_custom_call.1} parent=35 // pred_check
          %p230 = pneg %p78
        $region42: #{tpu_custom_call.1} parent=35 // pred_check_branch
          %232 = sbr.rel (%p230) target = $region44
        $region43: #{tpu_custom_call.1} parent=35 // pred_region
          %234 = dma.done [#allocation6], 512
        $region44: #{tpu_custom_call.1} parent=35 // pred_fallthru
          _
        %s235 = sand.u32 %s44, 1
        %s236 = scalar_lea.sflag [#allocation3], %s235
        %s237 = sand.u32 %s44, 1
        %s238 = smul.addr %s237, 128
        %s239 = scalar_lea.vmem [#allocation2], %s238
        %p240 = pneg %p57
        %p241 = pneg %p54
        %p242 = pneg %p78
        %p243 = pneg %p75
        %p244 = pneg %p99
        %p245 = pneg %p96
        %p246 = pneg %p120
        %p247 = pneg %p117
        %p248 = pneg %p148
        %p249 = pneg %p145
        %s250 = sand.u32 %s135, 1
        %s251 = scalar_lea.sflag [#allocation4], %s250
        %s252 = sand.u32 %s135, 1
        %s253 = smul.addr %s252, 32
        %s254 = scalar_lea.vmem [#allocation7], %s253
        %s255 = smul.u32 4, %s26
        %s256 = smul.u32 4, %s27
        %s257 = smul.u32 4, %s26
        %v258 = vld [vmem:[%s224] sm:$0x3]
        %v259 = vld [vmem:[%s224 + $0x4] sm:$0x3]
        %v260 = vld [vmem:[%s224 + $0x8] sm:$0x3]
        %v261 = vld [vmem:[%s224 + $0xc] sm:$0x3]
        %v262 = vld [vmem:[%s224 + $0x20] sm:$0x3]
        %v263 = vld [vmem:[%s224 + $0x24] sm:$0x3]
        %v264 = vld [vmem:[%s224 + $0x28] sm:$0x3]
        %v265 = vld [vmem:[%s224 + $0x2c] sm:$0x3]
        %v266 = vld [vmem:[%s224 + $0x40] sm:$0x3]
        %v267 = vld [vmem:[%s224 + $0x44] sm:$0x3]
        %v268 = vld [vmem:[%s224 + $0x48] sm:$0x3]
        %v269 = vld [vmem:[%s224 + $0x4c] sm:$0x3]
        %v270 = vld [vmem:[%s224 + $0x60] sm:$0x3]
        %v271 = vld [vmem:[%s224 + $0x64] sm:$0x3]
        %v272 = vld [vmem:[%s224 + $0x68] sm:$0x3]
        %v273 = vld [vmem:[%s224 + $0x6c] sm:$0x3]
        %v274 = vld [vmem:[#allocation5] sm:$0xff]
        %s275 = scalar_lea.vmem %s224, 16 [#allocation2]
        %v276 = vld [vmem:[%s275] sm:$0x3]
        %v277 = vld [vmem:[%s275 + $0x4] sm:$0x3]
        %v278 = vld [vmem:[%s275 + $0x8] sm:$0x3]
        %v279 = vld [vmem:[%s275 + $0xc] sm:$0x3]
        %v280 = vld [vmem:[%s275 + $0x20] sm:$0x3]
        %v281 = vld [vmem:[%s275 + $0x24] sm:$0x3]
        %v282 = vld [vmem:[%s275 + $0x28] sm:$0x3]
        %v283 = vld [vmem:[%s275 + $0x2c] sm:$0x3]
        %v284 = vld [vmem:[%s275 + $0x40] sm:$0x3]
        %v285 = vld [vmem:[%s275 + $0x44] sm:$0x3]
        %v286 = vld [vmem:[%s275 + $0x48] sm:$0x3]
        %v287 = vld [vmem:[%s275 + $0x4c] sm:$0x3]
        %v288 = vld [vmem:[%s275 + $0x60] sm:$0x3]
        %v289 = vld [vmem:[%s275 + $0x64] sm:$0x3]
        %v290 = vld [vmem:[%s275 + $0x68] sm:$0x3]
        %v291 = vld [vmem:[%s275 + $0x6c] sm:$0x3]
        %s292 = scalar_lea.vmem [#allocation5], 8
        %v293 = vld [vmem:[%s292] sm:$0xff]
        %310 = vst [vmem:[#allocation1] ss:$4 sm:$0xff] %v276
        %s311 = scalar_lea.vmem [#allocation1], 1
        %312 = vst [vmem:[%s311] ss:$4 sm:$0xff] %v277
        %s313 = scalar_lea.vmem [#allocation1], 2
        %314 = vst [vmem:[%s313] ss:$4 sm:$0xff] %v278
        %s315 = scalar_lea.vmem [#allocation1], 3
        %316 = vst [vmem:[%s315] ss:$4 sm:$0xff] %v279
        %s317 = scalar_lea.vmem [#allocation1], 32
        %318 = vst [vmem:[%s317] ss:$4 sm:$0xff] %v280
        %s319 = scalar_lea.vmem [#allocation1], 33
        %320 = vst [vmem:[%s319] ss:$4 sm:$0xff] %v281
        %s321 = scalar_lea.vmem [#allocation1], 34
        %322 = vst [vmem:[%s321] ss:$4 sm:$0xff] %v282
        %s323 = scalar_lea.vmem [#allocation1], 35
        %324 = vst [vmem:[%s323] ss:$4 sm:$0xff] %v283
        %v325 = vld.sshfl [vmem:[#allocation1] sm:$0xff pattern:$0x73625140]
        %v326 = vld.sshfl [vmem:[#allocation1 + $0x20] sm:$0xff pattern:$0x73625140]
        %327 = vst [vmem:[#allocation1] ss:$4 sm:$0xff] %v284
        %328 = vst [vmem:[%s311] ss:$4 sm:$0xff] %v285
        %329 = vst [vmem:[%s313] ss:$4 sm:$0xff] %v286
        %330 = vst [vmem:[%s315] ss:$4 sm:$0xff] %v287
        %331 = vst [vmem:[%s317] ss:$4 sm:$0xff] %v288
        %332 = vst [vmem:[%s319] ss:$4 sm:$0xff] %v289
        %333 = vst [vmem:[%s321] ss:$4 sm:$0xff] %v290
        %334 = vst [vmem:[%s323] ss:$4 sm:$0xff] %v291
        %v335 = vld.sshfl [vmem:[#allocation1] sm:$0xff pattern:$0x73625140]
        %v336 = vld.sshfl [vmem:[#allocation1 + $0x20] sm:$0xff pattern:$0x73625140]
        %vm337 = vcmask 64512
        %v338 = vsel %vm337, %v325, 0
        %v340 = vsel %vm337, %v326, 0
        %v342 = vsel %vm337, %v335, 0
        %v344 = vsel %vm337, %v336, 0
        %346 = vmatpush.msra.mxu0 0.0
        %347 = vmatpush.msra.mxu0 0.0
        %348 = vmatpush.msra.mxu0 0.0
        %349 = vmatpush.msra.mxu0 0.0
        %350 = vmatpush.msra.mxu0 0.0
        %351 = vmatpush.msra.mxu0 0.0
        %352 = vmatpush.msra.mxu0 0.0
        %353 = vmatpush.msra.mxu0 0.0
        %354 = vmatpush.msra.mxu0 0.0
        %355 = vmatpush.msra.mxu0 0.0
        %356 = vmatpush.msra.mxu0 0.0
        %357 = vmatpush.msra.mxu0 0.0
        %358 = vmatpush.msra.mxu0 0.0
        %359 = vmatpush.msra.mxu0 0.0
        %360 = vmatpush.msra.mxu0 0.0
        %361 = vmatpush.msra.mxu0 %v293
        %362 = vmatmul.f32.gmra.mxu0 %v338
        %v363 = vpop.f32.mrf.mxu0
        %v364 = vadd.f32 0.0, %v363
        %365 = vmatmul.f32.gmra.mxu0 %v340
        %v366 = vpop.f32.mrf.mxu0
        %v367 = vadd.f32 0.0, %v366
        %368 = vmatmul.f32.gmra.mxu0 %v342
        %v369 = vpop.f32.mrf.mxu0
        %v370 = vadd.f32 0.0, %v369
        %371 = vmatmul.f32.gmra.mxu0 %v344
        %v372 = vpop.f32.mrf.mxu0
        %v373 = vadd.f32 0.0, %v372
        %374 = vdwg.mxu0
        %391 = vst [vmem:[#allocation1] ss:$4 sm:$0xff] %v258
        %s392 = scalar_lea.vmem [#allocation1], 1
        %393 = vst [vmem:[%s392] ss:$4 sm:$0xff] %v259
        %s394 = scalar_lea.vmem [#allocation1], 2
        %395 = vst [vmem:[%s394] ss:$4 sm:$0xff] %v260
        %s396 = scalar_lea.vmem [#allocation1], 3
        %397 = vst [vmem:[%s396] ss:$4 sm:$0xff] %v261
        %s398 = scalar_lea.vmem [#allocation1], 32
        %399 = vst [vmem:[%s398] ss:$4 sm:$0xff] %v262
        %s400 = scalar_lea.vmem [#allocation1], 33
        %401 = vst [vmem:[%s400] ss:$4 sm:$0xff] %v263
        %s402 = scalar_lea.vmem [#allocation1], 34
        %403 = vst [vmem:[%s402] ss:$4 sm:$0xff] %v264
        %s404 = scalar_lea.vmem [#allocation1], 35
        %405 = vst [vmem:[%s404] ss:$4 sm:$0xff] %v265
        %v406 = vld.sshfl [vmem:[#allocation1] sm:$0xff pattern:$0x73625140]
        %v407 = vld.sshfl [vmem:[#allocation1 + $0x20] sm:$0xff pattern:$0x73625140]
        %408 = vst [vmem:[#allocation1] ss:$4 sm:$0xff] %v266
        %409 = vst [vmem:[%s392] ss:$4 sm:$0xff] %v267
        %410 = vst [vmem:[%s394] ss:$4 sm:$0xff] %v268
        %411 = vst [vmem:[%s396] ss:$4 sm:$0xff] %v269
        %412 = vst [vmem:[%s398] ss:$4 sm:$0xff] %v270
        %413 = vst [vmem:[%s400] ss:$4 sm:$0xff] %v271
        %414 = vst [vmem:[%s402] ss:$4 sm:$0xff] %v272
        %415 = vst [vmem:[%s404] ss:$4 sm:$0xff] %v273
        %v416 = vld.sshfl [vmem:[#allocation1] sm:$0xff pattern:$0x73625140]
        %v417 = vld.sshfl [vmem:[#allocation1 + $0x20] sm:$0xff pattern:$0x73625140]
        %v418 = vsel %vm337, %v406, 0
        %v420 = vsel %vm337, %v407, 0
        %v422 = vsel %vm337, %v416, 0
        %v424 = vsel %vm337, %v417, 0
        %426 = vmatpush.msra.mxu0 0.0
        %427 = vmatpush.msra.mxu0 0.0
        %428 = vmatpush.msra.mxu0 0.0
        %429 = vmatpush.msra.mxu0 0.0
        %430 = vmatpush.msra.mxu0 0.0
        %431 = vmatpush.msra.mxu0 0.0
        %432 = vmatpush.msra.mxu0 0.0
        %433 = vmatpush.msra.mxu0 0.0
        %434 = vmatpush.msra.mxu0 0.0
        %435 = vmatpush.msra.mxu0 0.0
        %436 = vmatpush.msra.mxu0 0.0
        %437 = vmatpush.msra.mxu0 0.0
        %438 = vmatpush.msra.mxu0 0.0
        %439 = vmatpush.msra.mxu0 0.0
        %440 = vmatpush.msra.mxu0 0.0
        %441 = vmatpush.msra.mxu0 %v274
        %442 = vmatmul.f32.gmra.mxu0 %v418
        %v443 = vpop.f32.mrf.mxu0
        %v444 = vadd.f32 %v364, %v443
        %445 = vmatmul.f32.gmra.mxu0 %v420
        %v446 = vpop.f32.mrf.mxu0
        %v447 = vadd.f32 %v367, %v446
        %448 = vmatmul.f32.gmra.mxu0 %v422
        %v449 = vpop.f32.mrf.mxu0
        %v450 = vadd.f32 %v370, %v449
        %451 = vmatmul.f32.gmra.mxu0 %v424
        %v452 = vpop.f32.mrf.mxu0
        %v453 = vadd.f32 %v373, %v452
        %454 = vdwg.mxu0
        %s455 = scalar_lea.vmem %s224, 2 [#allocation2]
        %v456 = vld [vmem:[%s455] sm:$0x3]
        %v457 = vld [vmem:[%s455 + $0x4] sm:$0x3]
        %v458 = vld [vmem:[%s455 + $0x8] sm:$0x3]
        %v459 = vld [vmem:[%s455 + $0xc] sm:$0x3]
        %v460 = vld [vmem:[%s455 + $0x20] sm:$0x3]
        %v461 = vld [vmem:[%s455 + $0x24] sm:$0x3]
        %v462 = vld [vmem:[%s455 + $0x28] sm:$0x3]
        %v463 = vld [vmem:[%s455 + $0x2c] sm:$0x3]
        %v464 = vld [vmem:[%s455 + $0x40] sm:$0x3]
        %v465 = vld [vmem:[%s455 + $0x44] sm:$0x3]
        %v466 = vld [vmem:[%s455 + $0x48] sm:$0x3]
        %v467 = vld [vmem:[%s455 + $0x4c] sm:$0x3]
        %v468 = vld [vmem:[%s455 + $0x60] sm:$0x3]
        %v469 = vld [vmem:[%s455 + $0x64] sm:$0x3]
        %v470 = vld [vmem:[%s455 + $0x68] sm:$0x3]
        %v471 = vld [vmem:[%s455 + $0x6c] sm:$0x3]
        %s472 = scalar_lea.vmem [#allocation5], 16
        %v473 = vld [vmem:[%s472] sm:$0xff]
        %490 = vst [vmem:[#allocation1] ss:$4 sm:$0xff] %v456
        %s491 = scalar_lea.vmem [#allocation1], 1
        %492 = vst [vmem:[%s491] ss:$4 sm:$0xff] %v457
        %s493 = scalar_lea.vmem [#allocation1], 2
        %494 = vst [vmem:[%s493] ss:$4 sm:$0xff] %v458
        %s495 = scalar_lea.vmem [#allocation1], 3
        %496 = vst [vmem:[%s495] ss:$4 sm:$0xff] %v459
        %s497 = scalar_lea.vmem [#allocation1], 32
        %498 = vst [vmem:[%s497] ss:$4 sm:$0xff] %v460
        %s499 = scalar_lea.vmem [#allocation1], 33
        %500 = vst [vmem:[%s499] ss:$4 sm:$0xff] %v461
        %s501 = scalar_lea.vmem [#allocation1], 34
        %502 = vst [vmem:[%s501] ss:$4 sm:$0xff] %v462
        %s503 = scalar_lea.vmem [#allocation1], 35
        %504 = vst [vmem:[%s503] ss:$4 sm:$0xff] %v463
        %v505 = vld.sshfl [vmem:[#allocation1] sm:$0xff pattern:$0x73625140]
        %v506 = vld.sshfl [vmem:[#allocation1 + $0x20] sm:$0xff pattern:$0x73625140]
        %507 = vst [vmem:[#allocation1] ss:$4 sm:$0xff] %v464
        %508 = vst [vmem:[%s491] ss:$4 sm:$0xff] %v465
        %509 = vst [vmem:[%s493] ss:$4 sm:$0xff] %v466
        %510 = vst [vmem:[%s495] ss:$4 sm:$0xff] %v467
        %511 = vst [vmem:[%s497] ss:$4 sm:$0xff] %v468
        %512 = vst [vmem:[%s499] ss:$4 sm:$0xff] %v469
        %513 = vst [vmem:[%s501] ss:$4 sm:$0xff] %v470
        %514 = vst [vmem:[%s503] ss:$4 sm:$0xff] %v471
        %v515 = vld.sshfl [vmem:[#allocation1] sm:$0xff pattern:$0x73625140]
        %v516 = vld.sshfl [vmem:[#allocation1 + $0x20] sm:$0xff pattern:$0x73625140]
        %v517 = vsel %vm337, %v505, 0
        %v519 = vsel %vm337, %v506, 0
        %v521 = vsel %vm337, %v515, 0
        %v523 = vsel %vm337, %v516, 0
        %525 = vmatpush.msra.mxu0 0.0
        %526 = vmatpush.msra.mxu0 0.0
        %527 = vmatpush.msra.mxu0 0.0
        %528 = vmatpush.msra.mxu0 0.0
        %529 = vmatpush.msra.mxu0 0.0
        %530 = vmatpush.msra.mxu0 0.0
        %531 = vmatpush.msra.mxu0 0.0
        %532 = vmatpush.msra.mxu0 0.0
        %533 = vmatpush.msra.mxu0 0.0
        %534 = vmatpush.msra.mxu0 0.0
        %535 = vmatpush.msra.mxu0 0.0
        %536 = vmatpush.msra.mxu0 0.0
        %537 = vmatpush.msra.mxu0 0.0
        %538 = vmatpush.msra.mxu0 0.0
        %539 = vmatpush.msra.mxu0 0.0
        %540 = vmatpush.msra.mxu0 %v473
        %541 = vmatmul.f32.gmra.mxu0 %v517
        %v542 = vpop.f32.mrf.mxu0
        %v543 = vadd.f32 0.0, %v542
        %544 = vmatmul.f32.gmra.mxu0 %v519
        %v545 = vpop.f32.mrf.mxu0
        %v546 = vadd.f32 0.0, %v545
        %547 = vmatmul.f32.gmra.mxu0 %v521
        %v548 = vpop.f32.mrf.mxu0
        %v549 = vadd.f32 0.0, %v548
        %550 = vmatmul.f32.gmra.mxu0 %v523
        %v551 = vpop.f32.mrf.mxu0
        %v552 = vadd.f32 0.0, %v551
        %553 = vdwg.mxu0
        %v554 = vadd.f32 %v444, %v543
        %v555 = vadd.f32 %v447, %v546
        %v556 = vadd.f32 %v450, %v549
        %v557 = vadd.f32 %v453, %v552
        %s558 = scalar_lea.vmem %s224, 18 [#allocation2]
        %v559 = vld [vmem:[%s558] sm:$0x3]
        %v560 = vld [vmem:[%s558 + $0x4] sm:$0x3]
        %v561 = vld [vmem:[%s558 + $0x8] sm:$0x3]
        %v562 = vld [vmem:[%s558 + $0xc] sm:$0x3]
        %v563 = vld [vmem:[%s558 + $0x20] sm:$0x3]
        %v564 = vld [vmem:[%s558 + $0x24] sm:$0x3]
        %v565 = vld [vmem:[%s558 + $0x28] sm:$0x3]
        %v566 = vld [vmem:[%s558 + $0x2c] sm:$0x3]
        %v567 = vld [vmem:[%s558 + $0x40] sm:$0x3]
        %v568 = vld [vmem:[%s558 + $0x44] sm:$0x3]
        %v569 = vld [vmem:[%s558 + $0x48] sm:$0x3]
        %v570 = vld [vmem:[%s558 + $0x4c] sm:$0x3]
        %v571 = vld [vmem:[%s558 + $0x60] sm:$0x3]
        %v572 = vld [vmem:[%s558 + $0x64] sm:$0x3]
        %v573 = vld [vmem:[%s558 + $0x68] sm:$0x3]
        %v574 = vld [vmem:[%s558 + $0x6c] sm:$0x3]
        %s575 = scalar_lea.vmem [#allocation5], 24
        %v576 = vld [vmem:[%s575] sm:$0xff]
        %593 = vst [vmem:[#allocation1] ss:$4 sm:$0xff] %v559
        %s594 = scalar_lea.vmem [#allocation1], 1
        %595 = vst [vmem:[%s594] ss:$4 sm:$0xff] %v560
        %s596 = scalar_lea.vmem [#allocation1], 2
        %597 = vst [vmem:[%s596] ss:$4 sm:$0xff] %v561
        %s598 = scalar_lea.vmem [#allocation1], 3
        %599 = vst [vmem:[%s598] ss:$4 sm:$0xff] %v562
        %s600 = scalar_lea.vmem [#allocation1], 32
        %601 = vst [vmem:[%s600] ss:$4 sm:$0xff] %v563
        %s602 = scalar_lea.vmem [#allocation1], 33
        %603 = vst [vmem:[%s602] ss:$4 sm:$0xff] %v564
        %s604 = scalar_lea.vmem [#allocation1], 34
        %605 = vst [vmem:[%s604] ss:$4 sm:$0xff] %v565
        %s606 = scalar_lea.vmem [#allocation1], 35
        %607 = vst [vmem:[%s606] ss:$4 sm:$0xff] %v566
        %v608 = vld.sshfl [vmem:[#allocation1] sm:$0xff pattern:$0x73625140]
        %v609 = vld.sshfl [vmem:[#allocation1 + $0x20] sm:$0xff pattern:$0x73625140]
        %610 = vst [vmem:[#allocation1] ss:$4 sm:$0xff] %v567
        %611 = vst [vmem:[%s594] ss:$4 sm:$0xff] %v568
        %612 = vst [vmem:[%s596] ss:$4 sm:$0xff] %v569
        %613 = vst [vmem:[%s598] ss:$4 sm:$0xff] %v570
        %614 = vst [vmem:[%s600] ss:$4 sm:$0xff] %v571
        %615 = vst [vmem:[%s602] ss:$4 sm:$0xff] %v572
        %616 = vst [vmem:[%s604] ss:$4 sm:$0xff] %v573
        %617 = vst [vmem:[%s606] ss:$4 sm:$0xff] %v574
        %v618 = vld.sshfl [vmem:[#allocation1] sm:$0xff pattern:$0x73625140]
        %v619 = vld.sshfl [vmem:[#allocation1 + $0x20] sm:$0xff pattern:$0x73625140]
        %v620 = vsel %vm337, %v608, 0
        %v622 = vsel %vm337, %v609, 0
        %v624 = vsel %vm337, %v618, 0
        %v626 = vsel %vm337, %v619, 0
        %628 = vmatpush.msra.mxu0 0.0
        %629 = vmatpush.msra.mxu0 0.0
        %630 = vmatpush.msra.mxu0 0.0
        %631 = vmatpush.msra.mxu0 0.0
        %632 = vmatpush.msra.mxu0 0.0
        %633 = vmatpush.msra.mxu0 0.0
        %634 = vmatpush.msra.mxu0 0.0
        %635 = vmatpush.msra.mxu0 0.0
        %636 = vmatpush.msra.mxu0 0.0
        %637 = vmatpush.msra.mxu0 0.0
        %638 = vmatpush.msra.mxu0 0.0
        %639 = vmatpush.msra.mxu0 0.0
        %640 = vmatpush.msra.mxu0 0.0
        %641 = vmatpush.msra.mxu0 0.0
        %642 = vmatpush.msra.mxu0 0.0
        %643 = vmatpush.msra.mxu0 %v576
        %644 = vmatmul.f32.gmra.mxu0 %v620
        %v645 = vpop.f32.mrf.mxu0
        %v646 = vadd.f32 0.0, %v645
        %647 = vmatmul.f32.gmra.mxu0 %v622
        %v648 = vpop.f32.mrf.mxu0
        %v649 = vadd.f32 0.0, %v648
        %650 = vmatmul.f32.gmra.mxu0 %v624
        %v651 = vpop.f32.mrf.mxu0
        %v652 = vadd.f32 0.0, %v651
        %653 = vmatmul.f32.gmra.mxu0 %v626
        %v654 = vpop.f32.mrf.mxu0
        %v655 = vadd.f32 0.0, %v654
        %656 = vdwg.mxu0
        %v657 = vadd.f32 %v554, %v646
        %v658 = vadd.f32 %v555, %v649
        %v659 = vadd.f32 %v556, %v652
        %v660 = vadd.f32 %v557, %v655
        %vm661 = vcmask 97280
        %v662 = vsel %vm661, %v657, 0.0
        %663 = vadd.xlane.f32.xlu0 %v662
        %v664 = vpop.xlane.xlu0 %663
        %v665 = vsel %vm661, %v658, 0.0
        %666 = vadd.xlane.f32.xlu0 %v665
        %v667 = vpop.xlane.xlu0 %666
        %v668 = vsel %vm661, %v659, 0.0
        %669 = vadd.xlane.f32.xlu0 %v668
        %v670 = vpop.xlane.xlu0 %669
        %v671 = vsel %vm661, %v660, 0.0
        %672 = vadd.xlane.f32.xlu0 %v671
        %v673 = vpop.xlane.xlu0 %672
        %v674 = vmul.f32 %v657, %v657
        %v675 = vmul.f32 %v658, %v658
        %v676 = vmul.f32 %v659, %v659
        %v677 = vmul.f32 %v660, %v660
        %v678 = vsel %vm661, %v674, 0.0
        %679 = vadd.xlane.f32.xlu0 %v678
        %v680 = vpop.xlane.xlu0 %679
        %v681 = vsel %vm661, %v675, 0.0
        %682 = vadd.xlane.f32.xlu0 %v681
        %v683 = vpop.xlane.xlu0 %682
        %v684 = vsel %vm661, %v676, 0.0
        %685 = vadd.xlane.f32.xlu0 %v684
        %v686 = vpop.xlane.xlu0 %685
        %v687 = vsel %vm661, %v677, 0.0
        %688 = vadd.xlane.f32.xlu0 %v687
        %v689 = vpop.xlane.xlu0 %688
        %v690 = vmul.f32 %v664, 0.083333336
        %v691 = vmul.f32 %v667, 0.083333336
        %v692 = vmul.f32 %v670, 0.083333336
        %v693 = vmul.f32 %v673, 0.083333336
        %v694 = vmul.f32 %v680, 0.083333336
        %v695 = vmul.f32 %v683, 0.083333336
        %v696 = vmul.f32 %v686, 0.083333336
        %v697 = vmul.f32 %v689, 0.083333336
        %v698 = vmul.f32 %v690, %v690
        %v699 = vmul.f32 %v691, %v691
        %v700 = vmul.f32 %v692, %v692
        %v701 = vmul.f32 %v693, %v693
        %v702 = vsub.f32 %v694, %v698
        %v703 = vsub.f32 %v695, %v699
        %v704 = vsub.f32 %v696, %v700
        %v705 = vsub.f32 %v697, %v701
        %v706 = vadd.f32 %v702, 1e-05
        %v707 = vadd.f32 %v703, 1e-05
        %v708 = vadd.f32 %v704, 1e-05
        %v709 = vadd.f32 %v705, 1e-05
        %v710 = vrsqrt.pop %v706
        %v711 = vmul.f32 %v710, %v706
        %v712 = vmul.f32 %v711, %v710
        %v713 = vmul.f32 0.5, %v712
        %v714 = vsub.f32 1.5, %v713
        %v715 = vmul.f32 %v710, %v714
        %vm716 = vweird.f32 %v706
        %vm717 = vweird.f32 %v710
        %vm718 = vmor %vm716, %vm717
        %v719 = vsel %vm718, %v710, %v715
        %v720 = vrsqrt.pop %v707
        %v721 = vmul.f32 %v720, %v707
        %v722 = vmul.f32 %v721, %v720
        %v723 = vmul.f32 0.5, %v722
        %v724 = vsub.f32 1.5, %v723
        %v725 = vmul.f32 %v720, %v724
        %vm726 = vweird.f32 %v707
        %vm727 = vweird.f32 %v720
        %vm728 = vmor %vm726, %vm727
        %v729 = vsel %vm728, %v720, %v725
        %v730 = vrsqrt.pop %v708
        %v731 = vmul.f32 %v730, %v708
        %v732 = vmul.f32 %v731, %v730
        %v733 = vmul.f32 0.5, %v732
        %v734 = vsub.f32 1.5, %v733
        %v735 = vmul.f32 %v730, %v734
        %vm736 = vweird.f32 %v708
        %vm737 = vweird.f32 %v730
        %vm738 = vmor %vm736, %vm737
        %v739 = vsel %vm738, %v730, %v735
        %v740 = vrsqrt.pop %v709
        %v741 = vmul.f32 %v740, %v709
        %v742 = vmul.f32 %v741, %v740
        %v743 = vmul.f32 0.5, %v742
        %v744 = vsub.f32 1.5, %v743
        %v745 = vmul.f32 %v740, %v744
        %vm746 = vweird.f32 %v709
        %vm747 = vweird.f32 %v740
        %vm748 = vmor %vm746, %vm747
        %v749 = vsel %vm748, %v740, %v745
        %v750 = vld [vmem:[%s2] sm:$0x1]
        %v751 = vld [vmem:[%s3] sm:$0x1]
        %v752 = vsub.f32 %v657, %v690
        %v753 = vsub.f32 %v658, %v691
        %v754 = vsub.f32 %v659, %v692
        %v755 = vsub.f32 %v660, %v693
        %v756 = vmul.f32 %v752, %v719
        %v757 = vmul.f32 %v753, %v729
        %v758 = vmul.f32 %v754, %v739
        %v759 = vmul.f32 %v755, %v749
        %v761 = vperm.slane %v750, 0
        %v763 = vmul.f32 %v756, %v761
        %v764 = vmul.f32 %v757, %v761
        %v765 = vmul.f32 %v758, %v761
        %v766 = vmul.f32 %v759, %v761
        %v768 = vperm.slane %v751, 0
        %v770 = vadd.f32 %v763, %v768
        %v771 = vadd.f32 %v764, %v768
        %v772 = vadd.f32 %v765, %v768
        %v773 = vadd.f32 %v766, %v768
        %774 = vst.msk [vmem:[%s254] sm:$0xff] %vm661, %v770
        %775 = vst.msk [vmem:[%s254 + $0x8] sm:$0xff] %vm661, %v771
        %776 = vst.msk [vmem:[%s254 + $0x10] sm:$0xff] %vm661, %v772
        %777 = vst.msk [vmem:[%s254 + $0x18] sm:$0xff] %vm661, %v773
        %s778 = sand.u32 %s135, 1
        %s779 = scalar_lea.sflag [#allocation4], %s778
        %s780 = sand.u32 %s135, 1
        %s781 = smul.addr %s780, 32
        %s782 = scalar_lea.vmem [#allocation7], %s781
        // Predicated region
        $region45: #{tpu_custom_call.1} parent=35 // pred_check
          %p783 = pneg %p145
        $region46: #{tpu_custom_call.1} parent=35 // pred_check_branch
          %785 = sbr.rel (%p783) target = $region48
        $region47: #{tpu_custom_call.1} parent=35 // pred_region
          %s786 = smul.u32 4, %s26
          %788 = vsyncadd %s779, 0
          %s789 = sadd.s32 %s27, %s786
          %s790 = smul.addr %s789, 8
          %s791 = scalar_lea.hbm %s4, %s790
          %s792 = sshll.u32 %s782, 4
          %s793 = int_to_ptr.vmem [resolvable:$true] %s792
          %s794 = sshll.u32 %s791, 4
          %s795 = int_to_ptr.hbm [resolvable:$true] %s794
          %800 = dma.vmem_to_hbm [thread:$0]  %s793, 512, %s795, %s779, 128, 128, 8
        $region48: #{tpu_custom_call.1} parent=35 // pred_fallthru
          _
      $region36: #{tpu_custom_call.1} parent=5 // pred_fallthru
        _
      %p801 = scmp.le.s32.totalorder 2, %s17
      // Predicated region
      $region49: #{tpu_custom_call.1} parent=5 // pred_check
        %p802 = pneg %p801
      $region50: #{tpu_custom_call.1} parent=5 // pred_check_branch
        %804 = sbr.rel (%p802) target = $region52
      $region51: #{tpu_custom_call.1} parent=5 // pred_region
        %s805 = ssub.s32 %s17, 2
        // Predicated region
        $region53: #{tpu_custom_call.1} parent=51 // pred_check
          %p806 = pneg %p151
        $region54: #{tpu_custom_call.1} parent=51 // pred_check_branch
          %808 = sbr.rel (%p806) target = $region56
        $region55: #{tpu_custom_call.1} parent=51 // pred_region
          %s809 = sand.u32 %s136, 1
          %s810 = scalar_lea.sflag [#allocation4], %s809
          %s811 = sand.u32 %s136, 1
          %s812 = smul.addr %s811, 32
          %s813 = scalar_lea.vmem [#allocation7], %s812
          %815 = dma.done %s810, 512
        $region56: #{tpu_custom_call.1} parent=51 // pred_fallthru
          _
      $region52: #{tpu_custom_call.1} parent=5 // pred_fallthru
        _
    $region6: #{tpu_custom_call.1} parent=1 // loop_footer
      %s21 = sadd.s32 1, %s17
    $region7: #{tpu_custom_call.1} parent=1 // loop_footer_branch
      %16 = sbr.rel target = $region3
    $region8: #{tpu_custom_call.1} parent=1 // loop_exit
      _
    %816 = vsyncpa [#allocation3], 1
    %s817 = scalar_lea.sflag [#allocation3], 1
    %818 = vsyncpa %s817, 1
    %819 = vsyncpa [#allocation6], 1
    %820 = vsyncpa [#allocation4], 1
    %s821 = scalar_lea.sflag [#allocation4], 1
    %822 = vsyncpa %s821, 1

</llo_original>
